<compile_context>
chip_gen: v6e
topology: v6e:2x2x1
jax: 0.10.0
libtpu: 0.0.40
codegen_flags: <defaults>
</compile_context>

<pallas_src>
import functools

import numpy as np
import jax
import jax.numpy as jnp
from jax.experimental import pallas as pl
from jax.experimental.pallas import tpu as pltpu

_NSQ_DTYPE = jnp.bfloat16      # dtype of the alpha N^2 carry streams
_NEG_INF = -1e30               # softmax mask value (f32, in-kernel only)


# --------------------------------------------------------------------------
# small helpers
# --------------------------------------------------------------------------
def _pick_tile(n, candidates):
    for t in candidates:
        if t <= n and n % t == 0:
            return t
    return n                   # full extent (always a legal block)


def _vmem_cap():
    """Generation-aware scoped-VMEM cap (48 MiB on 64-MiB chips, else 96 MiB)."""
    try:
        phys = int(pltpu.get_tpu_info().vmem_capacity_bytes)
    except Exception:
        phys = 64 * (1 << 20)                      # conservative (v7x-sized)
    return 48 * (1 << 20) if phys <= 64 * (1 << 20) else 96 * (1 << 20)


def _vmem_limit(est_bytes, cap):
    return int(min(cap, max(32 * (1 << 20), int(1.3 * est_bytes) + (2 << 20))))


def _hc_to_il_perm(num_heads, out_dim):
    """sigma[h*out_dim + d] = d*num_heads + h (head-contiguous -> interleaved)."""
    idx = np.arange(num_heads * out_dim)
    h = idx // out_dim
    d = idx % out_dim
    return jnp.asarray(d * num_heads + h, dtype=jnp.int32)


# --------------------------------------------------------------------------
# kernel 1: wide feature projection (all heads, scores and residual fused
#           into a single bf16 MXU matmul)
# --------------------------------------------------------------------------
def _proj_kernel(x_ref, rhs_ref, *refs, num_heads, out_dim, use_residual):
    if use_residual:
        bres_ref, emb_ref, hlr_ref, res_ref = refs
    else:
        emb_ref, hlr_ref = refs
    HD = num_heads * out_dim
    x = x_ref[...].astype(jnp.bfloat16)
    full = jnp.dot(x, rhs_ref[...], preferred_element_type=jnp.float32)  # [Tr, K]
    # emb emitted head-major [H, Tr, d_out] so the attention kernel never lane-slices
    for h in range(num_heads):
        emb_ref[h] = full[:, h * out_dim:(h + 1) * out_dim].astype(emb_ref.dtype)
    hlr_ref[...] = full[:, HD:HD + 2 * num_heads]            # fused [h_l | h_r] scores
    if use_residual:
        res_ref[...] = (full[:, HD + 2 * num_heads:HD + 2 * num_heads + HD]
                        + bres_ref[...]).astype(res_ref.dtype)


# --------------------------------------------------------------------------
# kernel 2: attention + aggregation, gridded over destination-row tiles
# --------------------------------------------------------------------------
def _attn_kernel(tab_ref, hl_ref, hr_ref, emb_ref, et_ref, *refs,
                 num_heads, out_dim, num_etypes, negative_slope, beta,
                 prev_heads, use_residual, use_activation, emit_alpha):
    i = 0
    aprev_ref = res_ref = aout_ref = None
    if prev_heads:
        aprev_ref = refs[i]; i += 1
    if use_residual:
        res_ref = refs[i]; i += 1
    out_ref = refs[i]; i += 1
    if emit_alpha:
        aout_ref = refs[i]; i += 1
    acc_ref = refs[i]                                        # [Td, HD] f32 scratch

    et = et_ref[...].astype(jnp.int32)                       # [Td, N] (sentinel==num_etypes)
    edge_mask = et < num_etypes                              # explicit per-edge mask
    hl = hl_ref[...]                                         # [H, N]  source scores
    hr = hr_ref[...]                                         # [Td, H] destination scores

    for h in range(num_heads):                               # heads fused (static loop)
        # edge-type logit term rebuilt from the tiny SMEM table (no N^2*H stream)
        he = jnp.zeros(et.shape, jnp.float32)
        for e in range(num_etypes):
            he = jnp.where(et == e, tab_ref[e, h], he)
        s = hr[:, h:h + 1] + hl[h:h + 1, :] + he
        s = jnp.where(s >= 0.0, s, negative_slope * s)       # LeakyReLU
        s = jnp.where(edge_mask, s, jnp.float32(_NEG_INF))   # mask non-edges
        m = jnp.max(s, axis=-1, keepdims=True)
        p = jnp.exp(s - m)
        p = jnp.where(edge_mask, p, 0.0)                     # robust no-in-edge rows -> 0
        denom = jnp.sum(p, axis=-1, keepdims=True)
        alpha = p * pl.reciprocal(jnp.maximum(denom, jnp.float32(1e-20)), approx=True)
        if prev_heads:                                       # edge residual
            pidx = h if prev_heads == num_heads else 0       # no broadcast materialization
            alpha = (1.0 - beta) * alpha + beta * aprev_ref[pidx].astype(jnp.float32)
        alpha_bf = alpha.astype(jnp.bfloat16)                # cast once, reused twice
        if emit_alpha:
            aout_ref[h] = alpha_bf
        acc_ref[:, h * out_dim:(h + 1) * out_dim] = jnp.dot(
            alpha_bf, emb_ref[h], preferred_element_type=jnp.float32)

    out = acc_ref[...]
    if use_residual:                                         # node residual
        out = out + res_ref[...].astype(jnp.float32)
    if use_activation:                                       # ELU (alpha=1), overflow-safe
        out = jnp.where(out > 0.0, out, jnp.exp(jnp.minimum(out, 0.0)) - 1.0)
    out_ref[...] = out.astype(out_ref.dtype)                 # single lane-dense store


# --------------------------------------------------------------------------
# one SimpleHGNConv layer
# --------------------------------------------------------------------------
def simple_hgn_conv(h, p, etype_eff, alpha_prev, negative_slope, beta, *,
                    prev_layout=None, emit_alpha=True, out_dtype=jnp.bfloat16):
    """Returns (h_out [N, H*d_out] head-contiguous, alpha [H, N, N] bf16 or None)."""
    N, d_in = h.shape
    H, d_out, edge_dim = p['num_heads'], p['out_dim'], p['edge_dim']
    num_etypes = p['W_r'].shape[0]
    HD = H * d_out
    use_residual = p['res_w'] is not None
    prev_heads = 0
    if alpha_prev is not None:
        prev_heads = H if alpha_prev.shape[0] == H else 1    # 1 => shared head 0
    vmem_cap = _vmem_cap()

    # ---- parameter glue: one fused bf16 RHS [W | W@A_lr | res_W] -------------
    W = p['W']                                               # [d_in, HD], col = h*d_out + d
    in_perm = None
    if prev_layout is not None:
        in_perm = _hc_to_il_perm(*prev_layout)               # head-contig input -> W rows
        W = W[in_perm, :]
    eye = jnp.eye(H, dtype=jnp.float32)
    A_l = (p['a_l'][:, :, None] * eye[:, None, :]).reshape(HD, H)
    A_r = (p['a_r'][:, :, None] * eye[:, None, :]).reshape(HD, H)
    W_lr = W @ jnp.concatenate([A_l, A_r], axis=1)           # [d_in, 2H]  (A_lr folded)
    rhs_parts = [W, W_lr]
    bres = None
    if use_residual:
        out_perm = _hc_to_il_perm(H, d_out)
        res_mat = jnp.transpose(p['res_w'])                  # [d_in, HD], interleaved cols
        if in_perm is not None:
            res_mat = res_mat[in_perm, :]
        res_mat = res_mat[:, out_perm]                       # -> head-contiguous cols
        bres = p['res_b'][out_perm].reshape(1, HD).astype(jnp.float32)
        rhs_parts.append(res_mat)
    rhs = jnp.concatenate(rhs_parts, axis=1).astype(jnp.bfloat16)   # [d_in, K]
    K = rhs.shape[1]

    # tiny per-(edge-type, head) logit table -> SMEM, gathered in-kernel
    proj = jnp.einsum('te,tef->tf', p['edge_emb'], p['W_r'])         # [T_e, edge_dim*H]
    proj = proj.reshape(num_etypes, H, edge_dim)
    he_table = jnp.sum(proj * p['a_e'][None], axis=-1).astype(jnp.float32)  # [T_e, H]

    # ---- stage 1: wide projection --------------------------------------------
    Tr = _pick_tile(N, (1024, 512, 256, 128, 64, 32, 16))
    proj_in_specs = [
        pl.BlockSpec((Tr, d_in), lambda i: (i, 0)),
        pl.BlockSpec((d_in, K), lambda i: (0, 0), pipeline_mode=pl.Buffered(1)),
    ]
    proj_args = [h, rhs]
    proj_out_specs = [
        pl.BlockSpec((H, Tr, d_out), lambda i: (0, i, 0)),
        pl.BlockSpec((Tr, 2 * H), lambda i: (i, 0)),
    ]
    proj_out_shape = [
        jax.ShapeDtypeStruct((H, N, d_out), jnp.bfloat16),   # head-major emb
        jax.ShapeDtypeStruct((N, 2 * H), jnp.float32),       # [h_l | h_r] scores
    ]
    if use_residual:
        proj_in_specs.append(pl.BlockSpec((1, HD), lambda i: (0, 0),
                                          pipeline_mode=pl.Buffered(1)))
        proj_args.append(bres)
        proj_out_specs.append(pl.BlockSpec((Tr, HD), lambda i: (i, 0)))
        proj_out_shape.append(jax.ShapeDtypeStruct((N, HD), jnp.bfloat16))

    xbytes = jnp.dtype(h.dtype).itemsize
    proj_est = (2 * Tr * d_in * xbytes + d_in * K * 2 + HD * 4
                + 2 * (H * Tr * d_out * 2 + Tr * 2 * H * 4)
                + (2 * Tr * HD * 2 if use_residual else 0)
                + Tr * K * 4)                                 # in-kernel f32 matmul result
    proj_out = pl.pallas_call(
        functools.partial(_proj_kernel, num_heads=H, out_dim=d_out,
                          use_residual=use_residual),
        grid=(N // Tr,),
        in_specs=proj_in_specs,
        out_specs=proj_out_specs,
        out_shape=proj_out_shape,
        compiler_params=pltpu.CompilerParams(
            dimension_semantics=("parallel",),
            vmem_limit_bytes=_vmem_limit(proj_est, vmem_cap)),
    )(*proj_args)
    if use_residual:
        emb_hm, hlr, res_all = proj_out
    else:
        emb_hm, hlr = proj_out
        res_all = None

    hl_t = jnp.transpose(hlr[:, :H])        # [H, N]  source scores (tiny glue transpose)
    hr = hlr[:, H:]                         # [N, H]  destination scores

    # ---- stage 2: attention / aggregation ------------------------------------
    # VMEM accounting (incl. f32 softmax temporaries) to size the dst tile Td.
    out_bytes = jnp.dtype(out_dtype).itemsize
    resident = H * N * d_out * 2 + H * N * 4 + (1 << 16)      # emb + hl (single-buffered)
    per_row = (2 * N * 1                                       # int8 edge-type stream
               + (2 * prev_heads * N * 2 if prev_heads else 0)
               + (2 * H * N * 2 if emit_alpha else 0)
               + 2 * H * 4
               + 2 * HD * out_bytes
               + (2 * HD * 2 if use_residual else 0)
               + 3 * N * 4                                     # f32 s/p/alpha temporaries
               + HD * 4)                                       # scratch accumulator
    budget = max(vmem_cap - resident - 4 * (1 << 20), 1)
    t_cap = max(32, budget // per_row)
    # Td multiple of 32 (int8 sublane packing) or full N.
    cands = tuple(t for t in (2048, 1024, 512, 256, 128, 64, 32) if t <= t_cap) or (32,)
    Td = _pick_tile(N, cands)
    # TODO(synk): for N large enough that resident emb/hl no longer fit v7x's
    # 64 MiB VMEM, add a source-tile grid axis with online softmax.

    attn_in_specs = [
        pl.BlockSpec(memory_space=pltpu.MemorySpace.SMEM),     # he_table [E, H]
        pl.BlockSpec((H, N), lambda i: (0, 0), pipeline_mode=pl.Buffered(1)),
        pl.BlockSpec((Td, H), lambda i: (i, 0)),
        pl.BlockSpec((H, N, d_out), lambda i: (0, 0, 0), pipeline_mode=pl.Buffered(1)),
        pl.BlockSpec((Td, N), lambda i: (i, 0)),               # int8 edge types (+mask)
    ]
    attn_args = [he_table, hl_t, hr, emb_hm, etype_eff]
    if prev_heads:
        attn_in_specs.append(pl.BlockSpec((prev_heads, Td, N), lambda i: (0, i, 0)))
        attn_args.append(alpha_prev)
    if use_residual:
        attn_in_specs.append(pl.BlockSpec((Td, HD), lambda i: (i, 0)))
        attn_args.append(res_all)
    attn_out_specs = [pl.BlockSpec((Td, HD), lambda i: (i, 0))]
    attn_out_shape = [jax.ShapeDtypeStruct((N, HD), out_dtype)]
    if emit_alpha:
        attn_out_specs.append(pl.BlockSpec((H, Td, N), lambda i: (0, i, 0)))
        attn_out_shape.append(jax.ShapeDtypeStruct((H, N, N), _NSQ_DTYPE))

    attn_est = resident + Td * per_row
    kernel = functools.partial(
        _attn_kernel, num_heads=H, out_dim=d_out, num_etypes=num_etypes,
        negative_slope=float(negative_slope), beta=float(beta),
        prev_heads=prev_heads, use_residual=use_residual,
        use_activation=p['activation'], emit_alpha=emit_alpha)
    attn_out = pl.pallas_call(
        kernel,
        grid=(N // Td,),
        in_specs=attn_in_specs,
        out_specs=attn_out_specs,
        out_shape=attn_out_shape,
        scratch_shapes=[pltpu.VMEM((Td, HD), jnp.float32)],
        compiler_params=pltpu.CompilerParams(
            dimension_semantics=("parallel",),
            vmem_limit_bytes=_vmem_limit(attn_est, vmem_cap)),
    )(*attn_args)
    if emit_alpha:
        h_out, alpha = attn_out
    else:
        h_out, alpha = attn_out[0], None
    return h_out, alpha


# --------------------------------------------------------------------------
# parameter init (identical layout / RNG stream to the reference version)
# --------------------------------------------------------------------------
def init_simple_hgn_params(key, edge_dim, num_etypes, in_dim, hidden_dim,
                           num_classes, num_layers, heads, residual):
    dims_in = [in_dim[0]] + [hidden_dim * heads[l - 1] for l in range(1, num_layers)]
    dims_out = [hidden_dim] * (num_layers - 1) + [num_classes]
    resid = [False] + [residual] * (num_layers - 1)
    act = [True] * (num_layers - 1) + [False]     # ELU on all but the last layer
    layers = []
    scale = 0.2
    for l in range(num_layers):
        d_in, d_out, H = dims_in[l], dims_out[l], heads[l]
        key, *ks = jax.random.split(key, 9)
        p = dict(
            num_heads=H, out_dim=d_out, edge_dim=edge_dim, activation=act[l],
            W=scale * jax.random.normal(ks[0], (d_in, H * d_out), jnp.float32),
            a_l=scale * jax.random.normal(ks[1], (H, d_out), jnp.float32),
            a_r=scale * jax.random.normal(ks[2], (H, d_out), jnp.float32),
            a_e=scale * jax.random.normal(ks[3], (H, edge_dim), jnp.float32),
            edge_emb=scale * jax.random.normal(ks[4], (num_etypes, edge_dim), jnp.float32),
            W_r=scale * jax.random.normal(ks[5], (num_etypes, edge_dim, edge_dim * H), jnp.float32),
        )
        if resid[l]:
            p['res_w'] = scale * jax.random.normal(ks[6], (H * d_out, d_in), jnp.float32)
            p['res_b'] = scale * jax.random.normal(ks[7], (H * d_out,), jnp.float32)
        else:
            p['res_w'] = None
            p['res_b'] = None
        layers.append(p)
    return layers


# --------------------------------------------------------------------------
# full forward (matches SimpleHGNLayer.forward semantics)
# --------------------------------------------------------------------------
def simple_hgn_layer_forward(h, adj, etype_mat, ntype, ntypes, layers,
                             negative_slope, beta):
    # TODO(synk): feat_drop (nn.Dropout) is treated as rate 0 (eval mode).
    num_etypes = layers[0]['W_r'].shape[0]
    # adjacency mask folded into a sentinel edge type once; shared by all layers
    etype_eff = jnp.where(adj > 0.0, etype_mat, num_etypes).astype(jnp.int8)
    alpha = None            # g.edata['alpha'] persists across layers within forward
    prev_layout = None
    n_layers = len(layers)
    for li, p in enumerate(layers):
        last = li == n_layers - 1
        h, alpha = simple_hgn_conv(
            h, p, etype_eff, alpha, negative_slope, beta,
            prev_layout=prev_layout,
            emit_alpha=not last,                               # last alpha never consumed
            out_dtype=jnp.float32 if last else jnp.bfloat16)
        prev_layout = (p['num_heads'], p['out_dim'])
        # h.flatten(1) is a no-op (already 2-D)
    # convert the (tiny) final output back to PyTorch's interleaved layout
    # (column = d * num_heads + head), matching permute(0,2,1)+view.
    Hl, dl = prev_layout
    N = h.shape[0]
    h = jnp.transpose(h.reshape(N, Hl, dl), (0, 2, 1)).reshape(N, dl * Hl)
    # to_hetero_feat: dynamic-shaped boolean split -> host-side glue.
    h_np = np.asarray(jax.device_get(h))
    t_np = np.asarray(ntype)
    h_dict = {name: h_np[np.where(t_np == i)[0]] for i, name in enumerate(ntypes)}
    return h_dict, h


if __name__ == "__main__":
    # small, deterministic configuration
    N = 16
    edge_dim, num_etypes = 8, 3
    in_dim = [16]
    hidden_dim, num_classes = 8, 4
    num_layers = 2
    heads = [2, 1]
    negative_slope = 0.2
    residual = True
    beta = 0.05
    ntypes = ['author', 'paper']

    key = jax.random.PRNGKey(0)
    k_h, k_p = jax.random.split(key, 2)
    h0 = jax.random.normal(k_h, (N, in_dim[0]), jnp.float32)
    ntype = np.array([0] * 9 + [1] * 7, np.int32)          # node types

    # deterministic graph: dense [N_dst, N_src] adjacency mask + edge types
    adj_np = np.zeros((N, N), np.float32)
    et_np = np.zeros((N, N), np.int32)
    for dst in range(N):
        for off in (0, 1, 3, 7):                           # self loop + 3 in-edges
            src = (dst + off) % N
            adj_np[dst, src] = 1.0
            et_np[dst, src] = (dst + 2 * src) % num_etypes
    adj = jnp.asarray(adj_np)
    etype_mat = jnp.asarray(et_np)

    layers = init_simple_hgn_params(k_p, edge_dim, num_etypes, in_dim,
                                    hidden_dim, num_classes, num_layers,
                                    heads, residual)

    h_dict, h_out = simple_hgn_layer_forward(h0, adj, etype_mat, ntype, ntypes,
                                             layers, negative_slope, beta)
    jax.block_until_ready(h_out)
    assert h_out.shape == (N, num_classes * heads[-1])
    assert sum(v.shape[0] for v in h_dict.values()) == N
    assert bool(jnp.all(jnp.isfinite(h_out)))
    print("KERNEL_OK")
</pallas_src>

<mosaic_0001>
module attributes {stable_mosaic.version = 11 : i64} {
  func.func @_proj_kernel(%arg0: i32, %arg1: memref<16x16xf32, #tpu.memory_space<vmem>>, %arg2: memref<16x20xbf16, #tpu.memory_space<vmem>>, %arg3: memref<2x16x8xbf16, #tpu.memory_space<vmem>>, %arg4: memref<16x4xf32, #tpu.memory_space<vmem>>) attributes {dimension_semantics = [#tpu.dimension_semantics<parallel>], iteration_bounds = array<i64: 1>, scalar_prefetch = 0 : i64, scratch_operands = 0 : i64, tpu.core_type = #tpu.core_type<tc>, window_params = [{transform_indices = @transform_0, window_bounds = array<i64: 16, 16>}, {pipeline_mode = #tpu.pipeline_mode<synchronous>, transform_indices = @transform_1, window_bounds = array<i64: 16, 20>}, {transform_indices = @transform_2, window_bounds = array<i64: 2, 16, 8>}, {transform_indices = @transform_3, window_bounds = array<i64: 16, 4>}]} {
    %c0 = arith.constant 0 : index
    %c0_0 = arith.constant 0 : index
    %0 = vector.load %arg1[%c0, %c0_0] : memref<16x16xf32, #tpu.memory_space<vmem>>, vector<16x16xf32>
    %1 = arith.truncf %0 : vector<16x16xf32> to vector<16x16xbf16>
    %c0_1 = arith.constant 0 : index
    %c0_2 = arith.constant 0 : index
    %2 = vector.load %arg2[%c0_1, %c0_2] : memref<16x20xbf16, #tpu.memory_space<vmem>>, vector<16x20xbf16>
    %cst = arith.constant dense<0.000000e+00> : vector<16x20xf32>
    %3 = tpu.matmul %1, %2, %cst {dimension_numbers = #tpu.dot_dimension_numbers<[1], [0], [0], [1], [0, 0, 1, 1], [], []>} : vector<16x16xbf16>, vector<16x20xbf16>, vector<16x20xf32> -> vector<16x20xf32>
    %4 = vector.extract_strided_slice %3 {offsets = [0, 0], sizes = [16, 8], strides = [1, 1]} : vector<16x20xf32> to vector<16x8xf32>
    %5 = arith.truncf %4 : vector<16x8xf32> to vector<16x8xbf16>
    %c0_3 = arith.constant 0 : index
    %c0_4 = arith.constant 0 : index
    %c0_5 = arith.constant 0 : index
    %6 = vector.load %arg3[%c0_3, %c0_4, %c0_5] : memref<2x16x8xbf16, #tpu.memory_space<vmem>>, vector<1x16x8xbf16>
    %7 = vector.shape_cast %6 : vector<1x16x8xbf16> to vector<16x8xbf16>
    %8 = vector.shape_cast %5 : vector<16x8xbf16> to vector<1x16x8xbf16>
    tpu.vector_store %arg3[%c0_3, %c0_4, %c0_5], %8 {strides = array<i32>} : memref<2x16x8xbf16, #tpu.memory_space<vmem>>, vector<1x16x8xbf16>,
    %9 = vector.extract_strided_slice %3 {offsets = [0, 8], sizes = [16, 8], strides = [1, 1]} : vector<16x20xf32> to vector<16x8xf32>
    %10 = arith.truncf %9 : vector<16x8xf32> to vector<16x8xbf16>
    %c1 = arith.constant 1 : index
    %c0_6 = arith.constant 0 : index
    %c0_7 = arith.constant 0 : index
    %11 = vector.load %arg3[%c1, %c0_6, %c0_7] : memref<2x16x8xbf16, #tpu.memory_space<vmem>>, vector<1x16x8xbf16>
    %12 = vector.shape_cast %11 : vector<1x16x8xbf16> to vector<16x8xbf16>
    %13 = vector.shape_cast %10 : vector<16x8xbf16> to vector<1x16x8xbf16>
    tpu.vector_store %arg3[%c1, %c0_6, %c0_7], %13 {strides = array<i32>} : memref<2x16x8xbf16, #tpu.memory_space<vmem>>, vector<1x16x8xbf16>,
    %14 = vector.extract_strided_slice %3 {offsets = [0, 16], sizes = [16, 4], strides = [1, 1]} : vector<16x20xf32> to vector<16x4xf32>
    %c0_8 = arith.constant 0 : index
    %c0_9 = arith.constant 0 : index
    %15 = vector.load %arg4[%c0_8, %c0_9] : memref<16x4xf32, #tpu.memory_space<vmem>>, vector<16x4xf32>
    tpu.vector_store %arg4[%c0_8, %c0_9], %14 {strides = array<i32>} : memref<16x4xf32, #tpu.memory_space<vmem>>, vector<16x4xf32>,
    return
  }
  func.func @transform_0(%arg0: i32) -> (i32, i32) {
    %c0_i32 = arith.constant 0 : i32
    %c0_i32_0 = arith.constant 0 : i32
    return %arg0, %c0_i32 : i32, i32
  }
  func.func @transform_1(%arg0: i32) -> (i32, i32) {
    %c0_i32 = arith.constant 0 : i32
    %c0_i32_0 = arith.constant 0 : i32
    %c0_i32_1 = arith.constant 0 : i32
    return %c0_i32, %c0_i32_0 : i32, i32
  }
  func.func @transform_2(%arg0: i32) -> (i32, i32, i32) {
    %c0_i32 = arith.constant 0 : i32
    %c0_i32_0 = arith.constant 0 : i32
    %c0_i32_1 = arith.constant 0 : i32
    return %c0_i32, %arg0, %c0_i32_0 : i32, i32, i32
  }
  func.func @transform_3(%arg0: i32) -> (i32, i32) {
    %c0_i32 = arith.constant 0 : i32
    %c0_i32_0 = arith.constant 0 : i32
    return %arg0, %c0_i32 : i32, i32
  }
}

</mosaic_0001>

<llo_original>
// kernel: tpu_custom_call.1
$region0: #{tpu_custom_call.1}
  #allocation0 [shape = 'u32[]', space=smem, size = 0x4, offset = 0x4, fixed_abs, tag = 'smem constant byte address 0x4 - core index']
  #allocation1 [shape = 'u32[144,128]{1,0:T(1,128)}', space=vmem, size = 0x12000, scoped, tag = 'internal scratch']
  %s0 = inlined_call_operand.hbm [shape: f32[16,16], index: 0, kind: input, shape index: {}]
  %s1 = inlined_call_operand.hbm [shape: bf16[16,20], index: 1, kind: input, shape index: {}]
  %s2 = inlined_call_operand.vmem [shape: bf16[2,16,8], index: 2, kind: output, shape index: {0}]
  %s3 = inlined_call_operand.vmem [shape: f32[16,4], index: 3, kind: output, shape index: {1}]
  %4 = xla_tuple %s2, %s3
  %s5 = sld [smem:[#allocation0]]
  $region34: #{tpu_custom_call.1} parent=0
    _
  %s7 = ssub.s32 1, %s5
  %s8 = scalar_select 0, %s7, %s5
  $region1: #{tpu_custom_call.1} parent=0
    #allocation2 [shape = 'u8[8192]{0}', space=vmem, size = 0x2000, scoped, tag = 'input window, operand 0, single buffered']
    #allocation3 [shape = 's32[1]{0}', space=sflag, size = 0x4, scoped, tag = 'scoped memory for tpu_custom_call.1']
    #allocation4 [shape = 'u8[4096]{0}', space=vmem, size = 0x1000, scoped, tag = 'input window, operand 1, single buffered']
    #allocation5 [shape = 's32[1]{0}', space=sflag, size = 0x4, scoped, tag = 'scoped memory for tpu_custom_call.1']
    %9 = vsyncpa [#allocation3], 0
    %10 = vsyncpa [#allocation5], 0
    // Predicated region
    $region2: #{tpu_custom_call.1} parent=1 // pred_check
      _
    $region3: #{tpu_custom_call.1} parent=1 // pred_check_branch
      %12 = sbr.rel (0) target = $region5
    $region4: #{tpu_custom_call.1} parent=1 // pred_region
      %s14 = ssub.s32 256, 256
      %15 = vsyncadd [#allocation3], %s14
      %s16 = sshll.u32 [#allocation2], 4
      %s17 = int_to_ptr.vmem [resolvable:$true] %s16
      %22 = dma.hbm_to_vmem [thread:$0]  %s0, 256, %s17, [#allocation3], 128, 128, 8
    $region5: #{tpu_custom_call.1} parent=1 // pred_fallthru
      _
    // Predicated region
    $region6: #{tpu_custom_call.1} parent=1 // pred_check
      _
    $region7: #{tpu_custom_call.1} parent=1 // pred_check_branch
      %24 = sbr.rel (0) target = $region9
    $region8: #{tpu_custom_call.1} parent=1 // pred_region
      %s26 = ssub.s32 128, 128
      %27 = vsyncadd [#allocation5], %s26
      %s28 = sshll.u32 [#allocation4], 4
      %s29 = int_to_ptr.vmem [resolvable:$true] %s28
      %34 = dma.hbm_to_vmem [thread:$0]  %s1, 128, %s29, [#allocation5], 64, 64, 4
    $region9: #{tpu_custom_call.1} parent=1 // pred_fallthru
      _
    // Predicated region
    $region10: #{tpu_custom_call.1} parent=1 // pred_check
      _
    $region11: #{tpu_custom_call.1} parent=1 // pred_check_branch
      %36 = sbr.rel (0) target = $region13
    $region12: #{tpu_custom_call.1} parent=1 // pred_region
      %37 = dma.done [#allocation3], 256
    $region13: #{tpu_custom_call.1} parent=1 // pred_fallthru
      _
    // Predicated region
    $region14: #{tpu_custom_call.1} parent=1 // pred_check
      _
    $region15: #{tpu_custom_call.1} parent=1 // pred_check_branch
      %39 = sbr.rel (0) target = $region17
    $region16: #{tpu_custom_call.1} parent=1 // pred_region
      %40 = dma.done [#allocation5], 128
    $region17: #{tpu_custom_call.1} parent=1 // pred_fallthru
      _
    %v42 = vld [vmem:[#allocation2] sm:$0xff]
    %v43 = vld [vmem:[#allocation2 + $0x8] sm:$0xff]
    %v44 = vpack.c.bf16 %v43, %v42
    %v45 = vld [vmem:[#allocation4] sm:$0xf]
    %v46 = vld [vmem:[#allocation4 + $0x4] sm:$0xf]
    %v49 = vunpack.c.l.b16 %v45
    %v50 = vunpack.c.l.b16 %v46
    %v51 = vpack.c.b16 %v50, %v49
    %vm53 = vcmask 130048
    %v55 = vsel %vm53, %v44, 0
    %57 = vmatprep.subr.bf16.mxu0 0
    %58 = vmatpush1.bf16.msra.mxu0 0
    %59 = vmatprep.subr.bf16.mxu0 0
    %60 = vmatpush1.bf16.msra.mxu0 0
    %61 = vmatprep.subr.bf16.mxu0 0
    %62 = vmatpush1.bf16.msra.mxu0 0
    %63 = vmatprep.subr.bf16.mxu0 0
    %64 = vmatpush1.bf16.msra.mxu0 0
    %65 = vmatprep.subr.bf16.mxu0 0
    %66 = vmatpush1.bf16.msra.mxu0 0
    %67 = vmatprep.subr.bf16.mxu0 0
    %68 = vmatpush1.bf16.msra.mxu0 0
    %69 = vmatprep.subr.bf16.mxu0 0
    %70 = vmatpush1.bf16.msra.mxu0 0
    %71 = vmatprep.subr.bf16.mxu0 0
    %72 = vmatpush1.bf16.msra.mxu0 %v51
    %73 = vmatprep.subr.bf16.mxu0 0
    %74 = vmatpush2.bf16.msra.mxu0 0
    %75 = vmatprep.subr.bf16.mxu0 0
    %76 = vmatpush2.bf16.msra.mxu0 0
    %77 = vmatprep.subr.bf16.mxu0 0
    %78 = vmatpush2.bf16.msra.mxu0 0
    %79 = vmatprep.subr.bf16.mxu0 0
    %80 = vmatpush2.bf16.msra.mxu0 0
    %81 = vmatprep.subr.bf16.mxu0 0
    %82 = vmatpush2.bf16.msra.mxu0 0
    %83 = vmatprep.subr.bf16.mxu0 0
    %84 = vmatpush2.bf16.msra.mxu0 0
    %85 = vmatprep.subr.bf16.mxu0 0
    %86 = vmatpush2.bf16.msra.mxu0 0
    %87 = vmatprep.subr.bf16.mxu0 0
    %88 = vmatpush2.bf16.msra.mxu0 0
    %89 = vmatprep.mubr.bf16.mxu0 0
    %90 = vmatmul.mubr.bf16.gmra.mxu0 %v55
    %v91 = vpop.f32.mrf.mxu0
    %v92 = vadd.f32 0.0, %v91
    %v93 = vpop.f32.mrf.mxu0
    %v94 = vpop.f32.mrf.mxu0
    %v95 = vadd.f32 0.0, %v94
    %v96 = vpop.f32.mrf.mxu0
    %97 = vdwg.mxu0
    %v98 = vpack.c.bf16 %v95, %v92
    %v100 = vunpack.c.l.b16 %v98
    %v101 = vunpack.c.h.b16 %v98
    %v102 = vpack.c.b16 %v100, %v100
    %v103 = vpack.c.b16 %v101, %v101
    %vm106 = vcmask 60416
    %107 = vst.msk [vmem:[%s2] sm:$0xf] %vm106, %v102
    %108 = vst.msk [vmem:[%s2 + $0x4] sm:$0xf] %vm106, %v103
    %109 = vrot.lane.b32.xlu0 %v102, 120
    %v110 = vpop.permute.xlu0 %109
    %111 = vrot.lane.b32.xlu0 %v103, 120
    %v112 = vpop.permute.xlu0 %111
    %s115 = scalar_lea.vmem %s2, 8
    %116 = vst.msk [vmem:[%s115] sm:$0xf] %vm106, %v110
    %117 = vst.msk [vmem:[%s115 + $0x4] sm:$0xf] %vm106, %v112
    %120 = vrot.lane.b32.xlu0 %v92, 112
    %v121 = vpop.permute.xlu0 %120
    %122 = vrot.lane.b32.xlu0 %v95, 112
    %v123 = vpop.permute.xlu0 %122
    %vm126 = vcmask 31744
    %127 = vst.msk [vmem:[%s3] sm:$0xff] %vm126, %v121
    %128 = vst.msk [vmem:[%s3 + $0x8] sm:$0xff] %vm126, %v123
    // Predicated region
    $region18: #{tpu_custom_call.1} parent=1 // pred_check
      _
    $region19: #{tpu_custom_call.1} parent=1 // pred_check_branch
      %130 = sbr.rel (0) target = $region21
    $region20: #{tpu_custom_call.1} parent=1 // pred_region
      _
    $region21: #{tpu_custom_call.1} parent=1 // pred_fallthru
      _
    // Predicated region
    $region22: #{tpu_custom_call.1} parent=1 // pred_check
      _
    $region23: #{tpu_custom_call.1} parent=1 // pred_check_branch
      %132 = sbr.rel (0) target = $region25
    $region24: #{tpu_custom_call.1} parent=1 // pred_region
      _
    $region25: #{tpu_custom_call.1} parent=1 // pred_fallthru
      _
    // Predicated region
    $region26: #{tpu_custom_call.1} parent=1 // pred_check
      _
    $region27: #{tpu_custom_call.1} parent=1 // pred_check_branch
      %134 = sbr.rel (0) target = $region29
    $region28: #{tpu_custom_call.1} parent=1 // pred_region
      _
    $region29: #{tpu_custom_call.1} parent=1 // pred_fallthru
      _
    // Predicated region
    $region30: #{tpu_custom_call.1} parent=1 // pred_check
      _
    $region31: #{tpu_custom_call.1} parent=1 // pred_check_branch
      %136 = sbr.rel (0) target = $region33
    $region32: #{tpu_custom_call.1} parent=1 // pred_region
      _
    $region33: #{tpu_custom_call.1} parent=1 // pred_fallthru
      _
    %137 = vsyncpa [#allocation3], 1
    %138 = vsyncpa [#allocation5], 1

</llo_original>
